<compile_context>
chip_gen: v6e
topology: v6e:2x2x1
jax: 0.10.0
libtpu: 0.0.40
codegen_flags: <defaults>
</compile_context>

<pallas_src>
import functools

import jax
import jax.numpy as jnp
from jax import lax
from jax.experimental import pallas as pl
from jax.experimental.pallas import tpu as pltpu

_GAMMA = 1.0  # focal_loss_function(1)


def _focal_elem(logits_f32, fg, bg):
    """Per-element (un-normalized) focal loss terms, gamma = 1.

    Only two transcendental chains per element: one softplus (log_sigmoid) and
    one exp; log(1-p) comes from the exact identity log(1-p) = log(p) - x.
    """
    log_p = jax.nn.log_sigmoid(logits_f32)   # log(sigmoid(x)), stable
    p = jnp.exp(log_p)                       # sigmoid(x)
    log_1mp = log_p - logits_f32             # log(1 - sigmoid(x)), stable identity
    return -(fg * (1.0 - p) * log_p + bg * p * log_1mp)


def _mask_poking_loss_kernel(uncertainty,
                             obj_ref, unc_ref, fg_ref, bg_ref,  # (bn, 1, R, C) blocks
                             out_ref,                            # (1, 8, 128) partials
                             acc_onum, acc_oden, acc_unum, acc_uden):
    j = pl.program_id(1)

    @pl.when(j == 0)
    def _():
        acc_onum[...] = jnp.zeros_like(acc_onum)
        acc_oden[...] = jnp.zeros_like(acc_oden)
        acc_unum[...] = jnp.zeros_like(acc_unum)
        acc_uden[...] = jnp.zeros_like(acc_uden)

    # Cast inside the kernel (inputs may be bf16 / narrow masks).
    obj = obj_ref[...].astype(jnp.float32)
    unc = unc_ref[...].astype(jnp.float32)
    fg = fg_ref[...].astype(jnp.float32)
    bg = bg_ref[...].astype(jnp.float32)

    # Objectness focal terms (elementwise accumulate; no per-tile reduction).
    acc_onum[...] += _focal_elem(obj, fg, bg)
    acc_oden[...] += fg

    # Uncertainty target remap (select-based; obj == 0 gets fg+bg / 0, matching
    # the >= / <= formulation of the PyTorch module).
    if uncertainty:
        unc_fg = jnp.where(obj > 0.0, bg, jnp.where(obj < 0.0, fg, fg + bg))
        unc_bg = jnp.where(obj > 0.0, fg, jnp.where(obj < 0.0, bg, jnp.zeros_like(bg)))
    else:
        unc_fg = fg
        unc_bg = bg

    acc_unum[...] += _focal_elem(unc, unc_fg, unc_bg)
    acc_uden[...] += unc_fg

    # Epilogue: single cross-lane reduction per split, write lane-dense partials.
    @pl.when(j == pl.num_programs(1) - 1)
    def _():
        s_onum = jnp.sum(acc_onum[...])
        s_oden = jnp.sum(acc_oden[...])
        s_unum = jnp.sum(acc_unum[...])
        s_uden = jnp.sum(acc_uden[...])
        row = lax.broadcasted_iota(jnp.int32, out_ref.shape, 1)
        tile = (jnp.where(row == 0, s_onum, 0.0)
                + jnp.where(row == 1, s_oden, 0.0)
                + jnp.where(row == 2, s_unum, 0.0)
                + jnp.where(row == 3, s_uden, 0.0))
        out_ref[...] = tile


def _spatial_factor(h, w):
    """Free reshape of the contiguous H*W run into a lane-dense (R, C) block."""
    hw = h * w
    if hw % 128 == 0:
        return hw // 128, 128        # lane-dense: full 128-lane vregs
    return h, w                       # fallback: always legal, lane-sparse


def _pick_sample_block(n, hw, elem_budget):
    """Largest divisor of n with bn*hw <= budget; prefer an even block count so the
    leading 'parallel' grid axis can use both TensorCores on v7x."""
    divisors = [d for d in range(1, n + 1) if n % d == 0]
    fitting = [d for d in divisors if d * hw <= elem_budget] or [1]
    even_blocks = [d for d in fitting if (n // d) % 2 == 0 and (n // d) >= 2]
    return max(even_blocks) if even_blocks else max(fitting)


class MaskPokingLoss:
    """JAX/Pallas re-implementation of the PyTorch MaskPokingLoss module."""

    def __init__(self, uncertainty: bool):
        self.uncertainty = bool(uncertainty)
        # register_buffer('dummy_weight', tensor(1.0)) -> applied in the wrapper
        self.dummy_weight = jnp.float32(1.0)

    def __call__(self, poking_scores, poking_targets):
        n, c, h, w = poking_scores.shape
        assert c == 2 and poking_targets.shape == poking_scores.shape

        r, cc = _spatial_factor(h, w)
        hw = r * cc
        # Free, contiguous reshapes (NCHW -> N,2,R,C); no channel-split copies.
        scores = poking_scores.reshape(n, 2, r, cc)
        targets = poking_targets.reshape(n, 2, r, cc)

        bn = _pick_sample_block(n, hw, elem_budget=256 * 1024)
        n_blocks = n // bn
        num_parallel = 2 if n_blocks % 2 == 0 else 1
        n_inner = n_blocks // num_parallel

        def chan_map(chan):
            # block indices: (sample_block, channel, 0, 0)
            return lambda s, j: (s * n_inner + j, chan, 0, 0)

        blk = (bn, 1, r, cc)
        in_specs = [
            pl.BlockSpec(blk, chan_map(0)),   # objectness logits   (scores ch 0)
            pl.BlockSpec(blk, chan_map(1)),   # uncertainty logits  (scores ch 1)
            pl.BlockSpec(blk, chan_map(0)),   # foreground mask     (targets ch 0)
            pl.BlockSpec(blk, chan_map(1)),   # background mask     (targets ch 1)
        ]
        out_spec = pl.BlockSpec((1, 8, 128), lambda s, j: (s, 0, 0))
        acc_shapes = [pltpu.VMEM((bn, 1, r, cc), jnp.float32) for _ in range(4)]

        kernel = functools.partial(_mask_poking_loss_kernel, self.uncertainty)

        partials = pl.pallas_call(
            kernel,
            out_shape=jax.ShapeDtypeStruct((num_parallel, 8, 128), jnp.float32),
            grid_spec=pltpu.PrefetchScalarGridSpec(
                num_scalar_prefetch=0,
                grid=(num_parallel, n_inner),
                in_specs=in_specs,
                out_specs=out_spec,
                scratch_shapes=acc_shapes,
            ),
            compiler_params=pltpu.CompilerParams(
                dimension_semantics=("parallel", "arbitrary"),
                vmem_limit_bytes=32 * 1024 * 1024,   # safe on v5e/v6e/v7x
            ),
        )(scores, scores, targets, targets)

        # Combine per-split partials; apply weight / normalization here (tiny).
        sums = jnp.sum(partials[:, :4, 0], axis=0)   # [obj_num, obj_den, unc_num, unc_den]
        w_ = self.dummy_weight
        objectness_loss = w_ * sums[0] / jnp.maximum(sums[1], 1.0)
        uncertainty_loss = w_ * sums[2] / jnp.maximum(sums[3], 1.0)
        return objectness_loss + uncertainty_loss


def _reference(poking_scores, poking_targets, uncertainty, weight=1.0):
    """Pure-JAX reference for a sanity check."""
    obj = poking_scores[:, 0]
    unc = poking_scores[:, 1]
    fg = poking_targets[:, 0]
    bg = poking_targets[:, 1]

    def focal(x, f, b):
        p = jax.nn.sigmoid(x)
        num = jnp.sum(-f * (1.0 - p) * jax.nn.log_sigmoid(x)
                      - b * p * jax.nn.log_sigmoid(-x))
        return weight * num / jnp.maximum(jnp.sum(f), 1.0)

    obj_loss = focal(obj, fg, bg)
    if uncertainty:
        unc_fg = (obj >= 0) * bg + (obj <= 0) * fg
        unc_bg = (obj > 0) * fg + (obj < 0) * bg
    else:
        unc_fg, unc_bg = fg, bg
    return obj_loss + focal(unc, unc_fg, unc_bg)


if __name__ == "__main__":
    key = jax.random.PRNGKey(0)
    k_scores, k_fg, k_bg = jax.random.split(key, 3)

    N, H, W = 2, 16, 16
    poking_scores = jax.random.normal(k_scores, (N, 2, H, W), dtype=jnp.float32)
    fg_mask = (jax.random.uniform(k_fg, (N, H, W)) < 0.3).astype(jnp.float32)
    bg_mask = ((jax.random.uniform(k_bg, (N, H, W)) > 0.6) * (1.0 - fg_mask)
               ).astype(jnp.float32)
    poking_targets = jnp.stack([fg_mask, bg_mask], axis=1)  # [N, 2, H, W]

    module = MaskPokingLoss(uncertainty=True)
    loss = module(poking_scores, poking_targets)
    jax.block_until_ready(loss)

    ref = _reference(poking_scores, poking_targets, uncertainty=True)
    assert jnp.allclose(loss, ref, rtol=1e-5, atol=1e-5), (loss, ref)

    print("KERNEL_OK")
</pallas_src>

<mosaic_0001>
module attributes {stable_mosaic.version = 11 : i64} {
  func.func @_mask_poking_loss_kernel(%arg0: i32, %arg1: i32, %arg2: memref<1x1x2x128xf32, #tpu.memory_space<vmem>>, %arg3: memref<1x1x2x128xf32, #tpu.memory_space<vmem>>, %arg4: memref<1x1x2x128xf32, #tpu.memory_space<vmem>>, %arg5: memref<1x1x2x128xf32, #tpu.memory_space<vmem>>, %arg6: memref<1x8x128xf32, #tpu.memory_space<vmem>>, %arg7: memref<1x1x2x128xf32, #tpu.memory_space<vmem>>, %arg8: memref<1x1x2x128xf32, #tpu.memory_space<vmem>>, %arg9: memref<1x1x2x128xf32, #tpu.memory_space<vmem>>, %arg10: memref<1x1x2x128xf32, #tpu.memory_space<vmem>>) attributes {dimension_semantics = [#tpu.dimension_semantics<parallel>, #tpu.dimension_semantics<arbitrary>], iteration_bounds = array<i64: 2, 1>, scalar_prefetch = 0 : i64, scratch_operands = 4 : i64, tpu.core_type = #tpu.core_type<tc>, window_params = [{transform_indices = @transform_0, window_bounds = array<i64: 1, 1, 2, 128>}, {transform_indices = @transform_1, window_bounds = array<i64: 1, 1, 2, 128>}, {transform_indices = @transform_2, window_bounds = array<i64: 1, 1, 2, 128>}, {transform_indices = @transform_3, window_bounds = array<i64: 1, 1, 2, 128>}, {transform_indices = @transform_4, window_bounds = array<i64: 1, 8, 128>}]} {
    %c0_i32 = arith.constant 0 : i32
    %0 = arith.cmpi eq, %arg1, %c0_i32 : i32
    %1 = arith.extui %0 : i1 to i32
    %c0_i32_0 = arith.constant 0 : i32
    %2 = arith.cmpi ne, %1, %c0_i32_0 : i32
    scf.if %2 {
      %cst_66 = arith.constant 0.000000e+00 : f32
      %94 = vector.broadcast %cst_66 : f32 to vector<1x1x2x128xf32>
      %c0_67 = arith.constant 0 : index
      %c0_68 = arith.constant 0 : index
      %c0_69 = arith.constant 0 : index
      %c0_70 = arith.constant 0 : index
      %95 = vector.load %arg7[%c0_67, %c0_68, %c0_69, %c0_70] : memref<1x1x2x128xf32, #tpu.memory_space<vmem>>, vector<1x1x2x128xf32>
      tpu.vector_store %arg7[%c0_67, %c0_68, %c0_69, %c0_70], %94 {strides = array<i32>} : memref<1x1x2x128xf32, #tpu.memory_space<vmem>>, vector<1x1x2x128xf32>,
      %cst_71 = arith.constant 0.000000e+00 : f32
      %96 = vector.broadcast %cst_71 : f32 to vector<1x1x2x128xf32>
      %c0_72 = arith.constant 0 : index
      %c0_73 = arith.constant 0 : index
      %c0_74 = arith.constant 0 : index
      %c0_75 = arith.constant 0 : index
      %97 = vector.load %arg8[%c0_72, %c0_73, %c0_74, %c0_75] : memref<1x1x2x128xf32, #tpu.memory_space<vmem>>, vector<1x1x2x128xf32>
      tpu.vector_store %arg8[%c0_72, %c0_73, %c0_74, %c0_75], %96 {strides = array<i32>} : memref<1x1x2x128xf32, #tpu.memory_space<vmem>>, vector<1x1x2x128xf32>,
      %cst_76 = arith.constant 0.000000e+00 : f32
      %98 = vector.broadcast %cst_76 : f32 to vector<1x1x2x128xf32>
      %c0_77 = arith.constant 0 : index
      %c0_78 = arith.constant 0 : index
      %c0_79 = arith.constant 0 : index
      %c0_80 = arith.constant 0 : index
      %99 = vector.load %arg9[%c0_77, %c0_78, %c0_79, %c0_80] : memref<1x1x2x128xf32, #tpu.memory_space<vmem>>, vector<1x1x2x128xf32>
      tpu.vector_store %arg9[%c0_77, %c0_78, %c0_79, %c0_80], %98 {strides = array<i32>} : memref<1x1x2x128xf32, #tpu.memory_space<vmem>>, vector<1x1x2x128xf32>,
      %cst_81 = arith.constant 0.000000e+00 : f32
      %100 = vector.broadcast %cst_81 : f32 to vector<1x1x2x128xf32>
      %c0_82 = arith.constant 0 : index
      %c0_83 = arith.constant 0 : index
      %c0_84 = arith.constant 0 : index
      %c0_85 = arith.constant 0 : index
      %101 = vector.load %arg10[%c0_82, %c0_83, %c0_84, %c0_85] : memref<1x1x2x128xf32, #tpu.memory_space<vmem>>, vector<1x1x2x128xf32>
      tpu.vector_store %arg10[%c0_82, %c0_83, %c0_84, %c0_85], %100 {strides = array<i32>} : memref<1x1x2x128xf32, #tpu.memory_space<vmem>>, vector<1x1x2x128xf32>,
    } else {
    }
    %c0 = arith.constant 0 : index
    %c0_1 = arith.constant 0 : index
    %c0_2 = arith.constant 0 : index
    %c0_3 = arith.constant 0 : index
    %3 = vector.load %arg2[%c0, %c0_1, %c0_2, %c0_3] : memref<1x1x2x128xf32, #tpu.memory_space<vmem>>, vector<1x1x2x128xf32>
    %c0_4 = arith.constant 0 : index
    %c0_5 = arith.constant 0 : index
    %c0_6 = arith.constant 0 : index
    %c0_7 = arith.constant 0 : index
    %4 = vector.load %arg3[%c0_4, %c0_5, %c0_6, %c0_7] : memref<1x1x2x128xf32, #tpu.memory_space<vmem>>, vector<1x1x2x128xf32>
    %c0_8 = arith.constant 0 : index
    %c0_9 = arith.constant 0 : index
    %c0_10 = arith.constant 0 : index
    %c0_11 = arith.constant 0 : index
    %5 = vector.load %arg4[%c0_8, %c0_9, %c0_10, %c0_11] : memref<1x1x2x128xf32, #tpu.memory_space<vmem>>, vector<1x1x2x128xf32>
    %c0_12 = arith.constant 0 : index
    %c0_13 = arith.constant 0 : index
    %c0_14 = arith.constant 0 : index
    %c0_15 = arith.constant 0 : index
    %6 = vector.load %arg5[%c0_12, %c0_13, %c0_14, %c0_15] : memref<1x1x2x128xf32, #tpu.memory_space<vmem>>, vector<1x1x2x128xf32>
    %c0_16 = arith.constant 0 : index
    %c0_17 = arith.constant 0 : index
    %c0_18 = arith.constant 0 : index
    %c0_19 = arith.constant 0 : index
    %7 = vector.load %arg7[%c0_16, %c0_17, %c0_18, %c0_19] : memref<1x1x2x128xf32, #tpu.memory_space<vmem>>, vector<1x1x2x128xf32>
    %cst = arith.constant 0.000000e+00 : f32
    %8 = vector.broadcast %cst : f32 to vector<1x1x2x128xf32>
    %9 = arith.subf %8, %3 : vector<1x1x2x128xf32>
    %cst_20 = arith.constant 0.000000e+00 : f32
    %10 = vector.broadcast %cst_20 : f32 to vector<1x1x2x128xf32>
    %11 = arith.maximumf %9, %10 : vector<1x1x2x128xf32>
    %12 = vector.broadcast %cst_20 : f32 to vector<1x1x2x128xf32>
    %13 = arith.subf %9, %12 : vector<1x1x2x128xf32>
    %14 = arith.cmpf one, %13, %13 : vector<1x1x2x128xf32>
    %15 = vector.broadcast %cst_20 : f32 to vector<1x1x2x128xf32>
    %16 = arith.addf %9, %15 : vector<1x1x2x128xf32>
    %17 = math.absf %13 : vector<1x1x2x128xf32>
    %cst_21 = arith.constant 0.000000e+00 : f32
    %18 = vector.broadcast %cst_21 : f32 to vector<1x1x2x128xf32>
    %19 = arith.subf %18, %17 : vector<1x1x2x128xf32>
    %20 = math.exp %19 : vector<1x1x2x128xf32>
    %21 = math.log1p %20 : vector<1x1x2x128xf32>
    %22 = arith.addf %11, %21 : vector<1x1x2x128xf32>
    %23 = arith.select %14, %16, %22 : vector<1x1x2x128xi1>, vector<1x1x2x128xf32>
    %cst_22 = arith.constant 0.000000e+00 : f32
    %24 = vector.broadcast %cst_22 : f32 to vector<1x1x2x128xf32>
    %25 = arith.subf %24, %23 : vector<1x1x2x128xf32>
    %26 = math.exp %25 : vector<1x1x2x128xf32>
    %27 = arith.subf %25, %3 : vector<1x1x2x128xf32>
    %cst_23 = arith.constant 1.000000e+00 : f32
    %28 = vector.broadcast %cst_23 : f32 to vector<1x1x2x128xf32>
    %29 = arith.subf %28, %26 : vector<1x1x2x128xf32>
    %30 = arith.mulf %5, %29 : vector<1x1x2x128xf32>
    %31 = arith.mulf %30, %25 : vector<1x1x2x128xf32>
    %32 = arith.mulf %6, %26 : vector<1x1x2x128xf32>
    %33 = arith.mulf %32, %27 : vector<1x1x2x128xf32>
    %34 = arith.addf %31, %33 : vector<1x1x2x128xf32>
    %cst_24 = arith.constant 0.000000e+00 : f32
    %35 = vector.broadcast %cst_24 : f32 to vector<1x1x2x128xf32>
    %36 = arith.subf %35, %34 : vector<1x1x2x128xf32>
    %37 = arith.addf %7, %36 : vector<1x1x2x128xf32>
    %c0_25 = arith.constant 0 : index
    %c0_26 = arith.constant 0 : index
    %c0_27 = arith.constant 0 : index
    %c0_28 = arith.constant 0 : index
    %38 = vector.load %arg7[%c0_25, %c0_26, %c0_27, %c0_28] : memref<1x1x2x128xf32, #tpu.memory_space<vmem>>, vector<1x1x2x128xf32>
    tpu.vector_store %arg7[%c0_25, %c0_26, %c0_27, %c0_28], %37 {strides = array<i32>} : memref<1x1x2x128xf32, #tpu.memory_space<vmem>>, vector<1x1x2x128xf32>,
    %c0_29 = arith.constant 0 : index
    %c0_30 = arith.constant 0 : index
    %c0_31 = arith.constant 0 : index
    %c0_32 = arith.constant 0 : index
    %39 = vector.load %arg8[%c0_29, %c0_30, %c0_31, %c0_32] : memref<1x1x2x128xf32, #tpu.memory_space<vmem>>, vector<1x1x2x128xf32>
    %40 = arith.addf %39, %5 : vector<1x1x2x128xf32>
    %c0_33 = arith.constant 0 : index
    %c0_34 = arith.constant 0 : index
    %c0_35 = arith.constant 0 : index
    %c0_36 = arith.constant 0 : index
    %41 = vector.load %arg8[%c0_33, %c0_34, %c0_35, %c0_36] : memref<1x1x2x128xf32, #tpu.memory_space<vmem>>, vector<1x1x2x128xf32>
    tpu.vector_store %arg8[%c0_33, %c0_34, %c0_35, %c0_36], %40 {strides = array<i32>} : memref<1x1x2x128xf32, #tpu.memory_space<vmem>>, vector<1x1x2x128xf32>,
    %cst_37 = arith.constant 0.000000e+00 : f32
    %42 = vector.broadcast %cst_37 : f32 to vector<1x1x2x128xf32>
    %43 = arith.cmpf ogt, %3, %42 : vector<1x1x2x128xf32>
    %cst_38 = arith.constant 0.000000e+00 : f32
    %44 = vector.broadcast %cst_38 : f32 to vector<1x1x2x128xf32>
    %45 = arith.cmpf olt, %3, %44 : vector<1x1x2x128xf32>
    %46 = arith.addf %5, %6 : vector<1x1x2x128xf32>
    %47 = arith.select %45, %5, %46 : vector<1x1x2x128xi1>, vector<1x1x2x128xf32>
    %48 = arith.select %43, %6, %47 : vector<1x1x2x128xi1>, vector<1x1x2x128xf32>
    %cst_39 = arith.constant 0.000000e+00 : f32
    %49 = vector.broadcast %cst_39 : f32 to vector<1x1x2x128xf32>
    %50 = arith.cmpf ogt, %3, %49 : vector<1x1x2x128xf32>
    %cst_40 = arith.constant 0.000000e+00 : f32
    %51 = vector.broadcast %cst_40 : f32 to vector<1x1x2x128xf32>
    %52 = arith.cmpf olt, %3, %51 : vector<1x1x2x128xf32>
    %cst_41 = arith.constant 0.000000e+00 : f32
    %53 = vector.broadcast %cst_41 : f32 to vector<1x1x2x128xf32>
    %54 = arith.select %52, %6, %53 : vector<1x1x2x128xi1>, vector<1x1x2x128xf32>
    %55 = arith.select %50, %5, %54 : vector<1x1x2x128xi1>, vector<1x1x2x128xf32>
    %c0_42 = arith.constant 0 : index
    %c0_43 = arith.constant 0 : index
    %c0_44 = arith.constant 0 : index
    %c0_45 = arith.constant 0 : index
    %56 = vector.load %arg9[%c0_42, %c0_43, %c0_44, %c0_45] : memref<1x1x2x128xf32, #tpu.memory_space<vmem>>, vector<1x1x2x128xf32>
    %cst_46 = arith.constant 0.000000e+00 : f32
    %57 = vector.broadcast %cst_46 : f32 to vector<1x1x2x128xf32>
    %58 = arith.subf %57, %4 : vector<1x1x2x128xf32>
    %cst_47 = arith.constant 0.000000e+00 : f32
    %59 = vector.broadcast %cst_47 : f32 to vector<1x1x2x128xf32>
    %60 = arith.maximumf %58, %59 : vector<1x1x2x128xf32>
    %61 = vector.broadcast %cst_47 : f32 to vector<1x1x2x128xf32>
    %62 = arith.subf %58, %61 : vector<1x1x2x128xf32>
    %63 = arith.cmpf one, %62, %62 : vector<1x1x2x128xf32>
    %64 = vector.broadcast %cst_47 : f32 to vector<1x1x2x128xf32>
    %65 = arith.addf %58, %64 : vector<1x1x2x128xf32>
    %66 = math.absf %62 : vector<1x1x2x128xf32>
    %cst_48 = arith.constant 0.000000e+00 : f32
    %67 = vector.broadcast %cst_48 : f32 to vector<1x1x2x128xf32>
    %68 = arith.subf %67, %66 : vector<1x1x2x128xf32>
    %69 = math.exp %68 : vector<1x1x2x128xf32>
    %70 = math.log1p %69 : vector<1x1x2x128xf32>
    %71 = arith.addf %60, %70 : vector<1x1x2x128xf32>
    %72 = arith.select %63, %65, %71 : vector<1x1x2x128xi1>, vector<1x1x2x128xf32>
    %cst_49 = arith.constant 0.000000e+00 : f32
    %73 = vector.broadcast %cst_49 : f32 to vector<1x1x2x128xf32>
    %74 = arith.subf %73, %72 : vector<1x1x2x128xf32>
    %75 = math.exp %74 : vector<1x1x2x128xf32>
    %76 = arith.subf %74, %4 : vector<1x1x2x128xf32>
    %cst_50 = arith.constant 1.000000e+00 : f32
    %77 = vector.broadcast %cst_50 : f32 to vector<1x1x2x128xf32>
    %78 = arith.subf %77, %75 : vector<1x1x2x128xf32>
    %79 = arith.mulf %48, %78 : vector<1x1x2x128xf32>
    %80 = arith.mulf %79, %74 : vector<1x1x2x128xf32>
    %81 = arith.mulf %55, %75 : vector<1x1x2x128xf32>
    %82 = arith.mulf %81, %76 : vector<1x1x2x128xf32>
    %83 = arith.addf %80, %82 : vector<1x1x2x128xf32>
    %cst_51 = arith.constant 0.000000e+00 : f32
    %84 = vector.broadcast %cst_51 : f32 to vector<1x1x2x128xf32>
    %85 = arith.subf %84, %83 : vector<1x1x2x128xf32>
    %86 = arith.addf %56, %85 : vector<1x1x2x128xf32>
    %c0_52 = arith.constant 0 : index
    %c0_53 = arith.constant 0 : index
    %c0_54 = arith.constant 0 : index
    %c0_55 = arith.constant 0 : index
    %87 = vector.load %arg9[%c0_52, %c0_53, %c0_54, %c0_55] : memref<1x1x2x128xf32, #tpu.memory_space<vmem>>, vector<1x1x2x128xf32>
    tpu.vector_store %arg9[%c0_52, %c0_53, %c0_54, %c0_55], %86 {strides = array<i32>} : memref<1x1x2x128xf32, #tpu.memory_space<vmem>>, vector<1x1x2x128xf32>,
    %c0_56 = arith.constant 0 : index
    %c0_57 = arith.constant 0 : index
    %c0_58 = arith.constant 0 : index
    %c0_59 = arith.constant 0 : index
    %88 = vector.load %arg10[%c0_56, %c0_57, %c0_58, %c0_59] : memref<1x1x2x128xf32, #tpu.memory_space<vmem>>, vector<1x1x2x128xf32>
    %89 = arith.addf %88, %48 : vector<1x1x2x128xf32>
    %c0_60 = arith.constant 0 : index
    %c0_61 = arith.constant 0 : index
    %c0_62 = arith.constant 0 : index
    %c0_63 = arith.constant 0 : index
    %90 = vector.load %arg10[%c0_60, %c0_61, %c0_62, %c0_63] : memref<1x1x2x128xf32, #tpu.memory_space<vmem>>, vector<1x1x2x128xf32>
    tpu.vector_store %arg10[%c0_60, %c0_61, %c0_62, %c0_63], %89 {strides = array<i32>} : memref<1x1x2x128xf32, #tpu.memory_space<vmem>>, vector<1x1x2x128xf32>,
    %c0_i32_64 = arith.constant 0 : i32
    %91 = arith.cmpi eq, %arg1, %c0_i32_64 : i32
    %92 = arith.extui %91 : i1 to i32
    %c0_i32_65 = arith.constant 0 : i32
    %93 = arith.cmpi ne, %92, %c0_i32_65 : i32
    scf.if %93 {
      %c0_66 = arith.constant 0 : index
      %c0_67 = arith.constant 0 : index
      %c0_68 = arith.constant 0 : index
      %c0_69 = arith.constant 0 : index
      %94 = vector.load %arg7[%c0_66, %c0_67, %c0_68, %c0_69] : memref<1x1x2x128xf32, #tpu.memory_space<vmem>>, vector<1x1x2x128xf32>
      %95 = vector.shape_cast %94 : vector<1x1x2x128xf32> to vector<1x1x1x2x128xf32>
      %cst_70 = arith.constant dense<0.000000e+00> : vector<1xf32>
      %96 = vector.multi_reduction <add>, %95, %cst_70 [1, 2, 3, 4] : vector<1x1x1x2x128xf32> to vector<1xf32>
      %97 = vector.shape_cast %96 : vector<1xf32> to vector<1x1x1x1x1xf32>
      %98 = vector.extract %97[0, 0, 0, 0, 0] : f32 from vector<1x1x1x1x1xf32>
      %c0_71 = arith.constant 0 : index
      %c0_72 = arith.constant 0 : index
      %c0_73 = arith.constant 0 : index
      %c0_74 = arith.constant 0 : index
      %99 = vector.load %arg8[%c0_71, %c0_72, %c0_73, %c0_74] : memref<1x1x2x128xf32, #tpu.memory_space<vmem>>, vector<1x1x2x128xf32>
      %100 = vector.shape_cast %99 : vector<1x1x2x128xf32> to vector<1x1x1x2x128xf32>
      %cst_75 = arith.constant dense<0.000000e+00> : vector<1xf32>
      %101 = vector.multi_reduction <add>, %100, %cst_75 [1, 2, 3, 4] : vector<1x1x1x2x128xf32> to vector<1xf32>
      %102 = vector.shape_cast %101 : vector<1xf32> to vector<1x1x1x1x1xf32>
      %103 = vector.extract %102[0, 0, 0, 0, 0] : f32 from vector<1x1x1x1x1xf32>
      %c0_76 = arith.constant 0 : index
      %c0_77 = arith.constant 0 : index
      %c0_78 = arith.constant 0 : index
      %c0_79 = arith.constant 0 : index
      %104 = vector.load %arg9[%c0_76, %c0_77, %c0_78, %c0_79] : memref<1x1x2x128xf32, #tpu.memory_space<vmem>>, vector<1x1x2x128xf32>
      %105 = vector.shape_cast %104 : vector<1x1x2x128xf32> to vector<1x1x1x2x128xf32>
      %cst_80 = arith.constant dense<0.000000e+00> : vector<1xf32>
      %106 = vector.multi_reduction <add>, %105, %cst_80 [1, 2, 3, 4] : vector<1x1x1x2x128xf32> to vector<1xf32>
      %107 = vector.shape_cast %106 : vector<1xf32> to vector<1x1x1x1x1xf32>
      %108 = vector.extract %107[0, 0, 0, 0, 0] : f32 from vector<1x1x1x1x1xf32>
      %c0_81 = arith.constant 0 : index
      %c0_82 = arith.constant 0 : index
      %c0_83 = arith.constant 0 : index
      %c0_84 = arith.constant 0 : index
      %109 = vector.load %arg10[%c0_81, %c0_82, %c0_83, %c0_84] : memref<1x1x2x128xf32, #tpu.memory_space<vmem>>, vector<1x1x2x128xf32>
      %110 = vector.shape_cast %109 : vector<1x1x2x128xf32> to vector<1x1x1x2x128xf32>
      %cst_85 = arith.constant dense<0.000000e+00> : vector<1xf32>
      %111 = vector.multi_reduction <add>, %110, %cst_85 [1, 2, 3, 4] : vector<1x1x1x2x128xf32> to vector<1xf32>
      %112 = vector.shape_cast %111 : vector<1xf32> to vector<1x1x1x1x1xf32>
      %113 = vector.extract %112[0, 0, 0, 0, 0] : f32 from vector<1x1x1x1x1xf32>
      %114 = tpu.iota {dimensions = array<i32: 1>} : vector<1x8x128xi32>
      %c0_i32_86 = arith.constant 0 : i32
      %115 = vector.broadcast %c0_i32_86 : i32 to vector<1x8x128xi32>
      %116 = arith.cmpi eq, %114, %115 : vector<1x8x128xi32>
      %cst_87 = arith.constant 0.000000e+00 : f32
      %117 = vector.broadcast %98 : f32 to vector<1x8x128xf32>
      %118 = vector.broadcast %cst_87 : f32 to vector<1x8x128xf32>
      %119 = arith.select %116, %117, %118 : vector<1x8x128xi1>, vector<1x8x128xf32>
      %c1_i32 = arith.constant 1 : i32
      %120 = vector.broadcast %c1_i32 : i32 to vector<1x8x128xi32>
      %121 = arith.cmpi eq, %114, %120 : vector<1x8x128xi32>
      %cst_88 = arith.constant 0.000000e+00 : f32
      %122 = vector.broadcast %103 : f32 to vector<1x8x128xf32>
      %123 = vector.broadcast %cst_88 : f32 to vector<1x8x128xf32>
      %124 = arith.select %121, %122, %123 : vector<1x8x128xi1>, vector<1x8x128xf32>
      %125 = arith.addf %119, %124 : vector<1x8x128xf32>
      %c2_i32 = arith.constant 2 : i32
      %126 = vector.broadcast %c2_i32 : i32 to vector<1x8x128xi32>
      %127 = arith.cmpi eq, %114, %126 : vector<1x8x128xi32>
      %cst_89 = arith.constant 0.000000e+00 : f32
      %128 = vector.broadcast %108 : f32 to vector<1x8x128xf32>
      %129 = vector.broadcast %cst_89 : f32 to vector<1x8x128xf32>
      %130 = arith.select %127, %128, %129 : vector<1x8x128xi1>, vector<1x8x128xf32>
      %131 = arith.addf %125, %130 : vector<1x8x128xf32>
      %c3_i32 = arith.constant 3 : i32
      %132 = vector.broadcast %c3_i32 : i32 to vector<1x8x128xi32>
      %133 = arith.cmpi eq, %114, %132 : vector<1x8x128xi32>
      %cst_90 = arith.constant 0.000000e+00 : f32
      %134 = vector.broadcast %113 : f32 to vector<1x8x128xf32>
      %135 = vector.broadcast %cst_90 : f32 to vector<1x8x128xf32>
      %136 = arith.select %133, %134, %135 : vector<1x8x128xi1>, vector<1x8x128xf32>
      %137 = arith.addf %131, %136 : vector<1x8x128xf32>
      %c0_91 = arith.constant 0 : index
      %c0_92 = arith.constant 0 : index
      %c0_93 = arith.constant 0 : index
      %138 = vector.load %arg6[%c0_91, %c0_92, %c0_93] : memref<1x8x128xf32, #tpu.memory_space<vmem>>, vector<1x8x128xf32>
      tpu.vector_store %arg6[%c0_91, %c0_92, %c0_93], %137 {strides = array<i32>} : memref<1x8x128xf32, #tpu.memory_space<vmem>>, vector<1x8x128xf32>,
    } else {
    }
    return
  }
  func.func @transform_0(%arg0: i32, %arg1: i32) -> (i32, i32, i32, i32) {
    %c1_i32 = arith.constant 1 : i32
    %0 = arith.muli %arg0, %c1_i32 : i32
    %1 = arith.addi %0, %arg1 : i32
    %c0_i32 = arith.constant 0 : i32
    %c0_i32_0 = arith.constant 0 : i32
    %c0_i32_1 = arith.constant 0 : i32
    %c0_i32_2 = arith.constant 0 : i32
    return %1, %c0_i32, %c0_i32_0, %c0_i32_1 : i32, i32, i32, i32
  }
  func.func @transform_1(%arg0: i32, %arg1: i32) -> (i32, i32, i32, i32) {
    %c1_i32 = arith.constant 1 : i32
    %0 = arith.muli %arg0, %c1_i32 : i32
    %1 = arith.addi %0, %arg1 : i32
    %c1_i32_0 = arith.constant 1 : i32
    %c0_i32 = arith.constant 0 : i32
    %c0_i32_1 = arith.constant 0 : i32
    %c0_i32_2 = arith.constant 0 : i32
    return %1, %c1_i32_0, %c0_i32, %c0_i32_1 : i32, i32, i32, i32
  }
  func.func @transform_2(%arg0: i32, %arg1: i32) -> (i32, i32, i32, i32) {
    %c1_i32 = arith.constant 1 : i32
    %0 = arith.muli %arg0, %c1_i32 : i32
    %1 = arith.addi %0, %arg1 : i32
    %c0_i32 = arith.constant 0 : i32
    %c0_i32_0 = arith.constant 0 : i32
    %c0_i32_1 = arith.constant 0 : i32
    %c0_i32_2 = arith.constant 0 : i32
    return %1, %c0_i32, %c0_i32_0, %c0_i32_1 : i32, i32, i32, i32
  }
  func.func @transform_3(%arg0: i32, %arg1: i32) -> (i32, i32, i32, i32) {
    %c1_i32 = arith.constant 1 : i32
    %0 = arith.muli %arg0, %c1_i32 : i32
    %1 = arith.addi %0, %arg1 : i32
    %c1_i32_0 = arith.constant 1 : i32
    %c0_i32 = arith.constant 0 : i32
    %c0_i32_1 = arith.constant 0 : i32
    %c0_i32_2 = arith.constant 0 : i32
    return %1, %c1_i32_0, %c0_i32, %c0_i32_1 : i32, i32, i32, i32
  }
  func.func @transform_4(%arg0: i32, %arg1: i32) -> (i32, i32, i32) {
    %c0_i32 = arith.constant 0 : i32
    %c0_i32_0 = arith.constant 0 : i32
    %c0_i32_1 = arith.constant 0 : i32
    return %arg0, %c0_i32, %c0_i32_0 : i32, i32, i32
  }
}

</mosaic_0001>

<llo_original>
// kernel: tpu_custom_call.1
$region0: #{tpu_custom_call.1}
  #allocation0 [shape = 'u32[]', space=smem, size = 0x4, offset = 0x4, fixed_abs, tag = 'smem constant byte address 0x4 - core index']
  #allocation1 [shape = 'u32[144,128]{1,0:T(1,128)}', space=vmem, size = 0x12000, scoped, tag = 'internal scratch']
  #allocation2 [shape = 'f32[1,1,2,128]{3,2,1,0:T(2,128)}', space=vmem, size = 0x400, scoped, tag = 'scratch operand']
  #allocation3 [shape = 'f32[1,1,2,128]{3,2,1,0:T(2,128)}', space=vmem, size = 0x400, scoped, tag = 'scratch operand']
  #allocation4 [shape = 'f32[1,1,2,128]{3,2,1,0:T(2,128)}', space=vmem, size = 0x400, scoped, tag = 'scratch operand']
  #allocation5 [shape = 'f32[1,1,2,128]{3,2,1,0:T(2,128)}', space=vmem, size = 0x400, scoped, tag = 'scratch operand']
  %s0 = inlined_call_operand.hbm [shape: f32[2,2,2,128], index: 0, kind: input, shape index: {}]
  %s1 = inlined_call_operand.hbm [shape: f32[2,2,2,128], index: 1, kind: input, shape index: {}]
  %s2 = inlined_call_operand.hbm [shape: f32[2,2,2,128], index: 2, kind: input, shape index: {}]
  %s3 = inlined_call_operand.hbm [shape: f32[2,2,2,128], index: 3, kind: input, shape index: {}]
  %s4 = inlined_call_operand.hbm [shape: f32[2,8,128], index: 4, kind: output, shape index: {}]
  %s5 = sld [smem:[#allocation0]]
  $region73: #{tpu_custom_call.1} parent=0
    _
  %s7 = ssub.s32 1, %s5
  %s8 = scalar_select 0, %s7, %s5
  $region1: #{tpu_custom_call.1} parent=0
    #allocation6 [shape = 'u8[2048]{0}', space=vmem, size = 0x800, scoped, tag = 'input window, operand 0']
    #allocation7 [shape = 's32[2]{0}', space=sflag, size = 0x8, scoped, tag = 'scoped memory for tpu_custom_call.1']
    #allocation8 [shape = 's32[2]{0}', space=sflag, size = 0x8, scoped, tag = 'scoped memory for tpu_custom_call.1']
    #allocation9 [shape = 'u8[2048]{0}', space=vmem, size = 0x800, scoped, tag = 'input window, operand 1']
    #allocation10 [shape = 's32[2]{0}', space=sflag, size = 0x8, scoped, tag = 'scoped memory for tpu_custom_call.1']
    #allocation11 [shape = 'u8[2048]{0}', space=vmem, size = 0x800, scoped, tag = 'input window, operand 2']
    #allocation12 [shape = 'u8[2048]{0}', space=vmem, size = 0x800, scoped, tag = 'input window, operand 3']
    #allocation13 [shape = 's32[2]{0}', space=sflag, size = 0x8, scoped, tag = 'scoped memory for tpu_custom_call.1']
    #allocation14 [shape = 'u8[8192]{0}', space=vmem, size = 0x2000, scoped, tag = 'output window, operand 0']
    %9 = vsyncpa [#allocation7], 0
    %s10 = scalar_lea.sflag [#allocation7], 1
    %11 = vsyncpa %s10, 0
    %12 = vsyncpa [#allocation10], 0
    %s13 = scalar_lea.sflag [#allocation10], 1
    %14 = vsyncpa %s13, 0
    %15 = vsyncpa [#allocation13], 0
    %s16 = scalar_lea.sflag [#allocation13], 1
    %17 = vsyncpa %s16, 0
    %18 = vsyncpa [#allocation8], 0
    %s19 = scalar_lea.sflag [#allocation8], 1
    %20 = vsyncpa %s19, 0
    loop: start=0, step=1, limit=4
    $region2: #{tpu_custom_call.1} parent=1 // loop_pre_header
      _
    $region3: #{tpu_custom_call.1} parent=1 // loop_header
      %s22 = sphi 0, %s26
      %p23 = scmp.ge.s32.totalorder %s22, 4
      %s29 = sphi 0, %s41
      %s30 = sphi 0, %s37
      %s31 = sphi 0, %s29
      %s32 = sphi 0, %s30
      %s33 = sphi 0, %s31
      %s34 = sphi 0, %s32
      %s46 = sphi 0, %s48
      %s49 = sphi 0, %s46
      %s50 = sphi 0, %s49
      %s66 = sphi 0, %s50
      %s74 = sphi 0, %s76
      %s77 = sphi 0, %s74
      %s78 = sphi 0, %s77
      %s94 = sphi 0, %s78
      %s102 = sphi 0, %s104
      %s105 = sphi 0, %s102
      %s106 = sphi 0, %s105
      %s122 = sphi 0, %s106
      %s130 = sphi 0, %s132
      %s133 = sphi 0, %s130
      %s134 = sphi 0, %s133
      %s150 = sphi 0, %s134
      %s156 = sphi 0, %s158
      %s159 = sphi 0, %s156
      %s160 = sphi 0, %s159
      %s176 = sphi 0, %s160
    $region4: #{tpu_custom_call.1} parent=1 // loop_header_branch
      %25 = sbr.rel (%p23) target = $region8
    $region5: #{tpu_custom_call.1} parent=1 // loop_body
      %s27 = ssub.s32 %s22, 1
      %s28 = ssub.s32 %s22, 2
      %s35 = sadd.s32 1, %s30
      %p36 = scmp.ge.s32.totalorder %s35, 1
      %s37 = scalar_select %p36, 0, %s35
      %s38 = sadd.s32 1, %s29
      %s39 = scalar_select %p36, %s38, %s29
      %p40 = scmp.ge.s32.totalorder %s39, 2
      %s41 = scalar_select %p40, 0, %s39
      %s42 = sadd.s32 %s29, %s30
      %s43 = sadd.s32 %s41, %s37
      %s44 = ssub.s32 %s42, %s43
      %p45 = scmp.eq.s32.totalorder %s44, 0
      %s47 = sadd.s32 %s46, 1
      %s48 = scalar_select %p45, %s46, %s47
      %p51 = pneg %p45
      %p52 = scmp.eq.s32.totalorder %s22, 1
      %p53 = por %p51, %p52
      %p54 = scmp.ne.s32.totalorder %s46, %s49
      %p55 = scmp.eq.s32.totalorder %s22, 0
      %p56 = por %p54, %p55
      %p57 = scmp.ne.s32.totalorder %s46, %s49
      %p58 = scmp.eq.s32.totalorder %s27, 1
      %p59 = por %p57, %p58
      %p60 = scmp.ne.s32.totalorder %s49, %s50
      %p61 = scmp.eq.s32.totalorder %s27, 0
      %p62 = por %p60, %p61
      %p63 = scmp.ne.s32.totalorder %s49, %s50
      %p64 = scmp.eq.s32.totalorder %s28, 1
      %p65 = por %p63, %p64
      %p67 = scmp.ne.s32.totalorder %s50, %s66
      %p68 = scmp.eq.s32.totalorder %s28, 0
      %p69 = por %p67, %p68
      %s70 = sadd.s32 %s29, %s30
      %s71 = sadd.s32 %s41, %s37
      %s72 = ssub.s32 %s70, %s71
      %p73 = scmp.eq.s32.totalorder %s72, 0
      %s75 = sadd.s32 %s74, 1
      %s76 = scalar_select %p73, %s74, %s75
      %p79 = pneg %p73
      %p80 = scmp.eq.s32.totalorder %s22, 1
      %p81 = por %p79, %p80
      %p82 = scmp.ne.s32.totalorder %s74, %s77
      %p83 = scmp.eq.s32.totalorder %s22, 0
      %p84 = por %p82, %p83
      %p85 = scmp.ne.s32.totalorder %s74, %s77
      %p86 = scmp.eq.s32.totalorder %s27, 1
      %p87 = por %p85, %p86
      %p88 = scmp.ne.s32.totalorder %s77, %s78
      %p89 = scmp.eq.s32.totalorder %s27, 0
      %p90 = por %p88, %p89
      %p91 = scmp.ne.s32.totalorder %s77, %s78
      %p92 = scmp.eq.s32.totalorder %s28, 1
      %p93 = por %p91, %p92
      %p95 = scmp.ne.s32.totalorder %s78, %s94
      %p96 = scmp.eq.s32.totalorder %s28, 0
      %p97 = por %p95, %p96
      %s98 = sadd.s32 %s29, %s30
      %s99 = sadd.s32 %s41, %s37
      %s100 = ssub.s32 %s98, %s99
      %p101 = scmp.eq.s32.totalorder %s100, 0
      %s103 = sadd.s32 %s102, 1
      %s104 = scalar_select %p101, %s102, %s103
      %p107 = pneg %p101
      %p108 = scmp.eq.s32.totalorder %s22, 1
      %p109 = por %p107, %p108
      %p110 = scmp.ne.s32.totalorder %s102, %s105
      %p111 = scmp.eq.s32.totalorder %s22, 0
      %p112 = por %p110, %p111
      %p113 = scmp.ne.s32.totalorder %s102, %s105
      %p114 = scmp.eq.s32.totalorder %s27, 1
      %p115 = por %p113, %p114
      %p116 = scmp.ne.s32.totalorder %s105, %s106
      %p117 = scmp.eq.s32.totalorder %s27, 0
      %p118 = por %p116, %p117
      %p119 = scmp.ne.s32.totalorder %s105, %s106
      %p120 = scmp.eq.s32.totalorder %s28, 1
      %p121 = por %p119, %p120
      %p123 = scmp.ne.s32.totalorder %s106, %s122
      %p124 = scmp.eq.s32.totalorder %s28, 0
      %p125 = por %p123, %p124
      %s126 = sadd.s32 %s29, %s30
      %s127 = sadd.s32 %s41, %s37
      %s128 = ssub.s32 %s126, %s127
      %p129 = scmp.eq.s32.totalorder %s128, 0
      %s131 = sadd.s32 %s130, 1
      %s132 = scalar_select %p129, %s130, %s131
      %p135 = pneg %p129
      %p136 = scmp.eq.s32.totalorder %s22, 1
      %p137 = por %p135, %p136
      %p138 = scmp.ne.s32.totalorder %s130, %s133
      %p139 = scmp.eq.s32.totalorder %s22, 0
      %p140 = por %p138, %p139
      %p141 = scmp.ne.s32.totalorder %s130, %s133
      %p142 = scmp.eq.s32.totalorder %s27, 1
      %p143 = por %p141, %p142
      %p144 = scmp.ne.s32.totalorder %s133, %s134
      %p145 = scmp.eq.s32.totalorder %s27, 0
      %p146 = por %p144, %p145
      %p147 = scmp.ne.s32.totalorder %s133, %s134
      %p148 = scmp.eq.s32.totalorder %s28, 1
      %p149 = por %p147, %p148
      %p151 = scmp.ne.s32.totalorder %s134, %s150
      %p152 = scmp.eq.s32.totalorder %s28, 0
      %p153 = por %p151, %p152
      %s154 = ssub.s32 %s29, %s41
      %p155 = scmp.eq.s32.totalorder %s154, 0
      %s157 = sadd.s32 %s156, 1
      %s158 = scalar_select %p155, %s156, %s157
      %p161 = pneg %p155
      %p162 = scmp.eq.s32.totalorder %s22, 1
      %p163 = por %p161, %p162
      %p164 = scmp.ne.s32.totalorder %s156, %s159
      %p165 = scmp.eq.s32.totalorder %s22, 0
      %p166 = por %p164, %p165
      %p167 = scmp.ne.s32.totalorder %s156, %s159
      %p168 = scmp.eq.s32.totalorder %s27, 1
      %p169 = por %p167, %p168
      %p170 = scmp.ne.s32.totalorder %s159, %s160
      %p171 = scmp.eq.s32.totalorder %s27, 0
      %p172 = por %p170, %p171
      %p173 = scmp.ne.s32.totalorder %s159, %s160
      %p174 = scmp.eq.s32.totalorder %s28, 1
      %p175 = por %p173, %p174
      %p177 = scmp.ne.s32.totalorder %s160, %s176
      %p178 = scmp.eq.s32.totalorder %s28, 0
      %p179 = por %p177, %p178
      %p180 = scmp.le.s32.totalorder 1, %s22
      %p181 = scmp.lt.s32.totalorder %s22, 3
      %p182 = pnand %p180, %p181
      %p183 = pneg %p182
      // Predicated region
      $region9: #{tpu_custom_call.1} parent=5 // pred_check
        _
      $region10: #{tpu_custom_call.1} parent=5 // pred_check_branch
        %185 = sbr.rel (%p182) target = $region12
      $region11: #{tpu_custom_call.1} parent=5 // pred_region
        %s186 = ssub.s32 %s22, 1
      $region12: #{tpu_custom_call.1} parent=5 // pred_fallthru
        _
      %p187 = scmp.lt.s32.totalorder %s22, 2
      // Predicated region
      $region13: #{tpu_custom_call.1} parent=5 // pred_check
        %p188 = pneg %p187
      $region14: #{tpu_custom_call.1} parent=5 // pred_check_branch
        %190 = sbr.rel (%p188) target = $region16
      $region15: #{tpu_custom_call.1} parent=5 // pred_region
        // Predicated region
        $region17: #{tpu_custom_call.1} parent=15 // pred_check
          %p191 = pneg %p56
        $region18: #{tpu_custom_call.1} parent=15 // pred_check_branch
          %193 = sbr.rel (%p191) target = $region20
        $region19: #{tpu_custom_call.1} parent=15 // pred_region
          %s194 = sand.u32 %s46, 1
          %s195 = scalar_lea.sflag [#allocation7], %s194
          %s196 = sand.u32 %s46, 1
          %s197 = smul.addr %s196, 2
          %s198 = scalar_lea.vmem [#allocation6], %s197
          %s199 = sadd.s32 %s29, %s30
          %s201 = ssub.s32 32, 32
          %202 = vsyncadd %s195, %s201
          %s203 = smul.addr %s199, 2
          %s204 = smul.addr %s203, 32
          %s205 = scalar_lea.hbm %s0, %s204
          %s207 = sshll.u32 %s198, 4
          %s208 = int_to_ptr.vmem [resolvable:$true] %s207
          %210 = dma.hbm_to_vmem [thread:$0]  %s205, 32, %s208, %s195
        $region20: #{tpu_custom_call.1} parent=15 // pred_fallthru
          _
        // Predicated region
        $region21: #{tpu_custom_call.1} parent=15 // pred_check
          %p211 = pneg %p84
        $region22: #{tpu_custom_call.1} parent=15 // pred_check_branch
          %213 = sbr.rel (%p211) target = $region24
        $region23: #{tpu_custom_call.1} parent=15 // pred_region
          %s214 = sand.u32 %s22, 1
          %s215 = scalar_lea.sflag [#allocation10], %s214
          %s216 = sand.u32 %s74, 1
          %s217 = smul.addr %s216, 2
          %s218 = scalar_lea.vmem [#allocation9], %s217
          %s219 = sadd.s32 %s29, %s30
          %s221 = ssub.s32 32, 32
          %222 = vsyncadd %s215, %s221
          %s223 = smul.addr %s219, 2
          %s224 = sadd.s32 1, %s223
          %s225 = smul.addr %s224, 32
          %s226 = scalar_lea.hbm %s1, %s225
          %s228 = sshll.u32 %s218, 4
          %s229 = int_to_ptr.vmem [resolvable:$true] %s228
          %231 = dma.hbm_to_vmem [thread:$0]  %s226, 32, %s229, %s215
        $region24: #{tpu_custom_call.1} parent=15 // pred_fallthru
          _
        // Predicated region
        $region25: #{tpu_custom_call.1} parent=15 // pred_check
          %p232 = pneg %p112
        $region26: #{tpu_custom_call.1} parent=15 // pred_check_branch
          %234 = sbr.rel (%p232) target = $region28
        $region27: #{tpu_custom_call.1} parent=15 // pred_region
          %s235 = sand.u32 %s22, 1
          %s236 = scalar_lea.sflag [#allocation10], %s235
          %s237 = sand.u32 %s102, 1
          %s238 = smul.addr %s237, 2
          %s239 = scalar_lea.vmem [#allocation11], %s238
          %s240 = sadd.s32 %s29, %s30
          %s242 = ssub.s32 32, 32
          %243 = vsyncadd %s236, %s242
          %s244 = smul.addr %s240, 2
          %s245 = smul.addr %s244, 32
          %s246 = scalar_lea.hbm %s2, %s245
          %s248 = sshll.u32 %s239, 4
          %s249 = int_to_ptr.vmem [resolvable:$true] %s248
          %251 = dma.hbm_to_vmem [thread:$0]  %s246, 32, %s249, %s236
        $region28: #{tpu_custom_call.1} parent=15 // pred_fallthru
          _
        // Predicated region
        $region29: #{tpu_custom_call.1} parent=15 // pred_check
          %p252 = pneg %p140
        $region30: #{tpu_custom_call.1} parent=15 // pred_check_branch
          %254 = sbr.rel (%p252) target = $region32
        $region31: #{tpu_custom_call.1} parent=15 // pred_region
          %s255 = sand.u32 %s130, 1
          %s256 = scalar_lea.sflag [#allocation13], %s255
          %s257 = sand.u32 %s130, 1
          %s258 = smul.addr %s257, 2
          %s259 = scalar_lea.vmem [#allocation12], %s258
          %s260 = sadd.s32 %s29, %s30
          %s262 = ssub.s32 32, 32
          %263 = vsyncadd %s256, %s262
          %s264 = smul.addr %s260, 2
          %s265 = sadd.s32 1, %s264
          %s266 = smul.addr %s265, 32
          %s267 = scalar_lea.hbm %s3, %s266
          %s269 = sshll.u32 %s259, 4
          %s270 = int_to_ptr.vmem [resolvable:$true] %s269
          %272 = dma.hbm_to_vmem [thread:$0]  %s267, 32, %s270, %s256
        $region32: #{tpu_custom_call.1} parent=15 // pred_fallthru
          _
      $region16: #{tpu_custom_call.1} parent=5 // pred_fallthru
        _
      %p273 = scmp.le.s32.totalorder 1, %s22
      %p274 = scmp.lt.s32.totalorder %s22, 3
      %p275 = pnand %p273, %p274
      %p276 = pneg %p275
      // Predicated region
      $region33: #{tpu_custom_call.1} parent=5 // pred_check
        _
      $region34: #{tpu_custom_call.1} parent=5 // pred_check_branch
        %278 = sbr.rel (%p275) target = $region36
      $region35: #{tpu_custom_call.1} parent=5 // pred_region
        %s279 = ssub.s32 %s22, 1
        %s280 = sand.u32 %s49, 1
        %s281 = scalar_lea.sflag [#allocation7], %s280
        %s282 = sand.u32 %s49, 1
        %s283 = smul.addr %s282, 2
        %s284 = scalar_lea.vmem [#allocation6], %s283
        // Predicated region
        $region37: #{tpu_custom_call.1} parent=35 // pred_check
          %p285 = pneg %p62
        $region38: #{tpu_custom_call.1} parent=35 // pred_check_branch
          %287 = sbr.rel (%p285) target = $region40
        $region39: #{tpu_custom_call.1} parent=35 // pred_region
          %288 = dma.done %s281, 32
        $region40: #{tpu_custom_call.1} parent=35 // pred_fallthru
          _
        %s289 = sand.u32 %s27, 1
        %s290 = scalar_lea.sflag [#allocation10], %s289
        %s291 = sand.u32 %s77, 1
        %s292 = smul.addr %s291, 2
        %s293 = scalar_lea.vmem [#allocation9], %s292
        // Predicated region
        $region41: #{tpu_custom_call.1} parent=35 // pred_check
          %p294 = pneg %p90
        $region42: #{tpu_custom_call.1} parent=35 // pred_check_branch
          %296 = sbr.rel (%p294) target = $region44
        $region43: #{tpu_custom_call.1} parent=35 // pred_region
          %297 = dma.done %s290, 32
        $region44: #{tpu_custom_call.1} parent=35 // pred_fallthru
          _
        %s298 = sand.u32 %s27, 1
        %s299 = scalar_lea.sflag [#allocation10], %s298
        %s300 = sand.u32 %s105, 1
        %s301 = smul.addr %s300, 2
        %s302 = scalar_lea.vmem [#allocation11], %s301
        // Predicated region
        $region45: #{tpu_custom_call.1} parent=35 // pred_check
          %p303 = pneg %p118
        $region46: #{tpu_custom_call.1} parent=35 // pred_check_branch
          %305 = sbr.rel (%p303) target = $region48
        $region47: #{tpu_custom_call.1} parent=35 // pred_region
          %306 = dma.done %s299, 32
        $region48: #{tpu_custom_call.1} parent=35 // pred_fallthru
          _
        %s307 = sand.u32 %s133, 1
        %s308 = scalar_lea.sflag [#allocation13], %s307
        %s309 = sand.u32 %s133, 1
        %s310 = smul.addr %s309, 2
        %s311 = scalar_lea.vmem [#allocation12], %s310
        // Predicated region
        $region49: #{tpu_custom_call.1} parent=35 // pred_check
          %p312 = pneg %p146
        $region50: #{tpu_custom_call.1} parent=35 // pred_check_branch
          %314 = sbr.rel (%p312) target = $region52
        $region51: #{tpu_custom_call.1} parent=35 // pred_region
          %315 = dma.done %s308, 32
        $region52: #{tpu_custom_call.1} parent=35 // pred_fallthru
          _
        %s316 = sand.u32 %s49, 1
        %s317 = scalar_lea.sflag [#allocation7], %s316
        %s318 = sand.u32 %s49, 1
        %s319 = smul.addr %s318, 2
        %s320 = scalar_lea.vmem [#allocation6], %s319
        %p321 = pneg %p62
        %p322 = pneg %p59
        %s323 = sand.u32 %s27, 1
        %s324 = scalar_lea.sflag [#allocation10], %s323
        %s325 = sand.u32 %s77, 1
        %s326 = smul.addr %s325, 2
        %s327 = scalar_lea.vmem [#allocation9], %s326
        %p328 = pneg %p90
        %p329 = pneg %p87
        %s330 = sand.u32 %s27, 1
        %s331 = scalar_lea.sflag [#allocation10], %s330
        %s332 = sand.u32 %s105, 1
        %s333 = smul.addr %s332, 2
        %s334 = scalar_lea.vmem [#allocation11], %s333
        %p335 = pneg %p118
        %p336 = pneg %p115
        %s337 = sand.u32 %s133, 1
        %s338 = scalar_lea.sflag [#allocation13], %s337
        %s339 = sand.u32 %s133, 1
        %s340 = smul.addr %s339, 2
        %s341 = scalar_lea.vmem [#allocation12], %s340
        %p342 = pneg %p146
        %p343 = pneg %p143
        %p344 = pneg %p172
        %p345 = pneg %p169
        %s346 = sand.u32 %s159, 1
        %s347 = scalar_lea.sflag [#allocation8], %s346
        %s348 = sand.u32 %s159, 1
        %s349 = smul.addr %s348, 8
        %s350 = scalar_lea.vmem [#allocation14], %s349
        %s351 = sadd.s32 %s31, %s32
        %s352 = sadd.s32 %s31, %s32
        %s353 = sadd.s32 %s31, %s32
        %s354 = sadd.s32 %s31, %s32
        %p355 = scmp.eq.s32.totalorder %s32, 0
        // Predicated region
        $region53: #{tpu_custom_call.1} parent=35 // pred_check
          %p356 = pneg %p355
        $region54: #{tpu_custom_call.1} parent=35 // pred_check_branch
          %358 = sbr.rel (%p356) target = $region56
        $region55: #{tpu_custom_call.1} parent=35 // pred_region
          %359 = vst [vmem:[#allocation2] sm:$0x3] 0.0
          %360 = vst [vmem:[#allocation3] sm:$0x3] 0.0
          %361 = vst [vmem:[#allocation4] sm:$0x3] 0.0
          %362 = vst [vmem:[#allocation5] sm:$0x3] 0.0
        $region56: #{tpu_custom_call.1} parent=35 // pred_fallthru
          _
        %v363 = vld [vmem:[%s284] sm:$0x3]
        %v364 = vld [vmem:[%s293] sm:$0x3]
        %v365 = vld [vmem:[%s302] sm:$0x3]
        %v366 = vld [vmem:[%s311] sm:$0x3]
        %v367 = vld [vmem:[#allocation2] sm:$0x3]
        %v368 = vsub.f32 0.0, %v363
        %v369 = vmax.f32 %v368, 0.0
        %vm370 = vcmp.ne.f32.partialorder %v368, %v368
        %v371 = vadd.f32 %v368, 0.0
        %v372 = vand.u32 2147483647, %v368
        %v373 = vsub.f32 0.0, %v372
        %v374 = vmul.f32 %v373, 1.442695
        %v375 = vpow.pop %v374
        %v376 = vadd.f32 %v375, 1.0
        %v377 = vlog2.pop %v376
        %v378 = vmul.f32 %v377, 0.6931472
        %v379 = vmul.f32 -0.5, %v375
        %v380 = vadd.f32 %v379, 1.0
        %v381 = vmul.f32 %v380, %v375
        %v382 = vand.u32 2147483647, %v375
        %vm383 = vcmp.lt.f32.partialorder %v382, 0.0004427343
        %v384 = vsel %vm383, %v381, %v378
        %v385 = vadd.f32 %v369, %v384
        %v386 = vsel %vm370, %v371, %v385
        %v387 = vsub.f32 0.0, %v386
        %v388 = vmul.f32 %v387, 1.442695
        %v389 = vpow.pop %v388
        %v390 = vsub.f32 %v387, %v363
        %v391 = vsub.f32 1.0, %v389
        %v392 = vmul.f32 %v365, %v391
        %v393 = vmul.f32 %v392, %v387
        %v394 = vmul.f32 %v366, %v389
        %v395 = vmul.f32 %v394, %v390
        %v396 = vadd.f32 %v393, %v395
        %v397 = vsub.f32 0.0, %v396
        %v398 = vadd.f32 %v367, %v397
        %399 = vst [vmem:[#allocation2] sm:$0x3] %v398
        %v400 = vld [vmem:[#allocation3] sm:$0x3]
        %v401 = vadd.f32 %v400, %v365
        %402 = vst [vmem:[#allocation3] sm:$0x3] %v401
        %vm403 = vcmp.gt.f32.partialorder %v363, 0.0
        %vm404 = vcmp.lt.f32.partialorder %v363, 0.0
        %v405 = vadd.f32 %v365, %v366
        %v406 = vsel %vm404, %v365, %v405
        %v407 = vsel %vm403, %v366, %v406
        %v408 = vsel %vm404, %v366, 0.0
        %v409 = vsel %vm403, %v365, %v408
        %v410 = vld [vmem:[#allocation4] sm:$0x3]
        %v411 = vsub.f32 0.0, %v364
        %v412 = vmax.f32 %v411, 0.0
        %vm413 = vcmp.ne.f32.partialorder %v411, %v411
        %v414 = vadd.f32 %v411, 0.0
        %v415 = vand.u32 2147483647, %v411
        %v416 = vsub.f32 0.0, %v415
        %v417 = vmul.f32 %v416, 1.442695
        %v418 = vpow.pop %v417
        %v419 = vadd.f32 %v418, 1.0
        %v420 = vlog2.pop %v419
        %v421 = vmul.f32 %v420, 0.6931472
        %v422 = vmul.f32 -0.5, %v418
        %v423 = vadd.f32 %v422, 1.0
        %v424 = vmul.f32 %v423, %v418
        %v425 = vand.u32 2147483647, %v418
        %vm426 = vcmp.lt.f32.partialorder %v425, 0.0004427343
        %v427 = vsel %vm426, %v424, %v421
        %v428 = vadd.f32 %v412, %v427
        %v429 = vsel %vm413, %v414, %v428
        %v430 = vsub.f32 0.0, %v429
        %v431 = vmul.f32 %v430, 1.442695
        %v432 = vpow.pop %v431
        %v433 = vsub.f32 %v430, %v364
        %v434 = vsub.f32 1.0, %v432
        %v435 = vmul.f32 %v407, %v434
        %v436 = vmul.f32 %v435, %v430
        %v437 = vmul.f32 %v409, %v432
        %v438 = vmul.f32 %v437, %v433
        %v439 = vadd.f32 %v436, %v438
        %v440 = vsub.f32 0.0, %v439
        %v441 = vadd.f32 %v410, %v440
        %442 = vst [vmem:[#allocation4] sm:$0x3] %v441
        %v443 = vld [vmem:[#allocation5] sm:$0x3]
        %v444 = vadd.f32 %v443, %v407
        %445 = vst [vmem:[#allocation5] sm:$0x3] %v444
        // Predicated region
        $region57: #{tpu_custom_call.1} parent=35 // pred_check
          %p446 = pneg %p355
        $region58: #{tpu_custom_call.1} parent=35 // pred_check_branch
          %448 = sbr.rel (%p446) target = $region60
        $region59: #{tpu_custom_call.1} parent=35 // pred_region
          %v449 = vld [vmem:[#allocation2] sm:$0x3]
          %vm450 = vcmask 1041408
          %v451 = vsel %vm450, %v449, 0.0
          %452 = vadd.xlane.f32.xlu0 %v451
          %v453 = vpop.xlane.xlu0 %452
          %v454 = vrot.slane %v453, 4
          %v455 = vadd.f32 %v453, %v454
          %v456 = vrot.slane %v455, 2
          %v457 = vadd.f32 %v455, %v456
          %v458 = vrot.slane %v457, 1
          %v459 = vadd.f32 %v457, %v458
          %s460 = vtos %v459
          %v461 = vld [vmem:[#allocation3] sm:$0x3]
          %v462 = vsel %vm450, %v461, 0.0
          %463 = vadd.xlane.f32.xlu0 %v462
          %v464 = vpop.xlane.xlu0 %463
          %v465 = vrot.slane %v464, 4
          %v466 = vadd.f32 %v464, %v465
          %v467 = vrot.slane %v466, 2
          %v468 = vadd.f32 %v466, %v467
          %v469 = vrot.slane %v468, 1
          %v470 = vadd.f32 %v468, %v469
          %s471 = vtos %v470
          %v472 = vld [vmem:[#allocation4] sm:$0x3]
          %v473 = vsel %vm450, %v472, 0.0
          %474 = vadd.xlane.f32.xlu0 %v473
          %v475 = vpop.xlane.xlu0 %474
          %v476 = vrot.slane %v475, 4
          %v477 = vadd.f32 %v475, %v476
          %v478 = vrot.slane %v477, 2
          %v479 = vadd.f32 %v477, %v478
          %v480 = vrot.slane %v479, 1
          %v481 = vadd.f32 %v479, %v480
          %s482 = vtos %v481
          %v483 = vld [vmem:[#allocation5] sm:$0x3]
          %v484 = vsel %vm450, %v483, 0.0
          %485 = vadd.xlane.f32.xlu0 %v484
          %v486 = vpop.xlane.xlu0 %485
          %v487 = vrot.slane %v486, 4
          %v488 = vadd.f32 %v486, %v487
          %v489 = vrot.slane %v488, 2
          %v490 = vadd.f32 %v488, %v489
          %v491 = vrot.slane %v490, 1
          %v492 = vadd.f32 %v490, %v491
          %s493 = vtos %v492
          %v494 = vlaneseq
          %v495 = vshrl.u32 %v494, 7
          %vm496 = vcmp.eq.s32.totalorder %v495, 0
          %v497 = vstv %s460
          %v498 = vsel %vm496, %v497, 0.0
          %vm499 = vcmp.eq.s32.totalorder %v495, 1
          %v500 = vstv %s471
          %v501 = vsel %vm499, %v500, 0.0
          %v502 = vadd.f32 %v498, %v501
          %vm503 = vcmp.eq.s32.totalorder %v495, 2
          %v504 = vstv %s482
          %v505 = vsel %vm503, %v504, 0.0
          %v506 = vadd.f32 %v502, %v505
          %vm507 = vcmp.eq.s32.totalorder %v495, 3
          %v508 = vstv %s493
          %v509 = vsel %vm507, %v508, 0.0
          %v510 = vadd.f32 %v506, %v509
          %511 = vst [vmem:[%s350] sm:$0xff] %v510
        $region60: #{tpu_custom_call.1} parent=35 // pred_fallthru
          _
        %s512 = sand.u32 %s159, 1
        %s513 = scalar_lea.sflag [#allocation8], %s512
        %s514 = sand.u32 %s159, 1
        %s515 = smul.addr %s514, 8
        %s516 = scalar_lea.vmem [#allocation14], %s515
        // Predicated region
        $region61: #{tpu_custom_call.1} parent=35 // pred_check
          %p517 = pneg %p169
        $region62: #{tpu_custom_call.1} parent=35 // pred_check_branch
          %519 = sbr.rel (%p517) target = $region64
        $region63: #{tpu_custom_call.1} parent=35 // pred_region
          %s521 = ssub.s32 128, 128
          %522 = vsyncadd %s513, %s521
          %s523 = smul.addr %s31, 128
          %s524 = scalar_lea.hbm %s4, %s523
          %s526 = sshll.u32 %s516, 4
          %s527 = int_to_ptr.vmem [resolvable:$true] %s526
          %529 = dma.vmem_to_hbm [thread:$0]  %s527, 128, %s524, %s513
        $region64: #{tpu_custom_call.1} parent=35 // pred_fallthru
          _
      $region36: #{tpu_custom_call.1} parent=5 // pred_fallthru
        _
      %p530 = scmp.le.s32.totalorder 2, %s22
      // Predicated region
      $region65: #{tpu_custom_call.1} parent=5 // pred_check
        %p531 = pneg %p530
      $region66: #{tpu_custom_call.1} parent=5 // pred_check_branch
        %533 = sbr.rel (%p531) target = $region68
      $region67: #{tpu_custom_call.1} parent=5 // pred_region
        %s534 = ssub.s32 %s22, 2
        // Predicated region
        $region69: #{tpu_custom_call.1} parent=67 // pred_check
          %p535 = pneg %p175
        $region70: #{tpu_custom_call.1} parent=67 // pred_check_branch
          %537 = sbr.rel (%p535) target = $region72
        $region71: #{tpu_custom_call.1} parent=67 // pred_region
          %s538 = sand.u32 %s160, 1
          %s539 = scalar_lea.sflag [#allocation8], %s538
          %s540 = sand.u32 %s160, 1
          %s541 = smul.addr %s540, 8
          %s542 = scalar_lea.vmem [#allocation14], %s541
          %543 = dma.done %s539, 128
        $region72: #{tpu_custom_call.1} parent=67 // pred_fallthru
          _
      $region68: #{tpu_custom_call.1} parent=5 // pred_fallthru
        _
    $region6: #{tpu_custom_call.1} parent=1 // loop_footer
      %s26 = sadd.s32 1, %s22
    $region7: #{tpu_custom_call.1} parent=1 // loop_footer_branch
      %21 = sbr.rel target = $region3
    $region8: #{tpu_custom_call.1} parent=1 // loop_exit
      _
    %544 = vsyncpa [#allocation7], 1
    %s545 = scalar_lea.sflag [#allocation7], 1
    %546 = vsyncpa %s545, 1
    %547 = vsyncpa [#allocation10], 1
    %s548 = scalar_lea.sflag [#allocation10], 1
    %549 = vsyncpa %s548, 1
    %550 = vsyncpa [#allocation13], 1
    %s551 = scalar_lea.sflag [#allocation13], 1
    %552 = vsyncpa %s551, 1
    %553 = vsyncpa [#allocation8], 1
    %s554 = scalar_lea.sflag [#allocation8], 1
    %555 = vsyncpa %s554, 1

</llo_original>
